<compile_context>
chip_gen: v6e
topology: v6e:2x2x1
jax: 0.10.0
libtpu: 0.0.40
codegen_flags: <defaults>
</compile_context>

<pallas_src>
import functools

import jax
import jax.numpy as jnp
from jax import lax
from jax.experimental import pallas as pl
from jax.experimental.pallas import tpu as pltpu


def _round_up(n, m):
    return ((n + m - 1) // m) * m


def _word2vec_kernel(x_ref, we_ref, wo_ref, o_ref, hid_ref, hidb_ref, *, kt):
    """One grid step.  Grid = (2*kt, bt); s = fused vocab axis, i = batch tile.

    x_ref   : (tb, tv)  input rows, vocab K-tile        (read in phase 1 only)
    we_ref  : (F,  tv)  W_emb vocab K-tile              (read in phase 1 only)
    wo_ref  : (tv, F)   W_out vocab N-tile              (read in phase 2 only)
    o_ref   : (tb, tv)  output vocab N-tile             (written in phase 2 only)
    hid_ref : (bt, tb, F) f32 hidden accumulators, one slab per batch tile (scratch)
    hidb_ref: (bt, tb, F) hidden cast to the weight dtype, written once per batch tile
    """
    s = pl.program_id(0)   # [0, kt) = phase 1 (accumulate),  [kt, 2kt) = phase 2 (emit)
    i = pl.program_id(1)   # batch tile

    @pl.when(s == 0)
    def _init():
        hid_ref[i] = jnp.zeros(hid_ref.shape[1:], hid_ref.dtype)

    @pl.when(s < kt)
    def _accumulate_hidden():
        # hidden[i] += x_tile @ W_emb_tile.T   (contract the vocab K-tile)
        hid_ref[i] += lax.dot_general(
            x_ref[...], we_ref[...],
            dimension_numbers=(((1,), (1,)), ((), ())),
            preferred_element_type=jnp.float32)

    @pl.when(s == kt)
    def _cast_hidden_once():
        # Hoisted f32 -> weight-dtype cast: once per batch tile, reused for all N-tiles.
        hidb_ref[i] = hid_ref[i].astype(hidb_ref.dtype)

    @pl.when(s >= kt)
    def _emit_output():
        # out[i, n_tile] = hidden[i] @ W_out_tile.T   (contract the feature axis)
        o_ref[...] = lax.dot_general(
            hidb_ref[i], wo_ref[...],
            dimension_numbers=(((1,), (1,)), ((), ())),
            preferred_element_type=jnp.float32).astype(o_ref.dtype)


def word2vec_forward(x, w_emb, w_out, *, tb=256, tv=2048,
                     out_dtype=jnp.float32,
                     vmem_budget_bytes=14 * 1024 * 1024):
    """Fused forward: (x @ w_emb.T) @ w_out.T.

    x     : (B, vocab)
    w_emb : (features, vocab)  -- nn.Linear(vocab, features).weight (native layout)
    w_out : (vocab, features)  -- nn.Linear(features, vocab).weight (native layout)
    Pass bf16 weights for best performance; accumulation is always f32.  `out_dtype`
    defaults to f32 (exact logits); set bf16 to halve the dominant output write stream.
    """
    B, V = x.shape
    F, V_e = w_emb.shape
    V_o, F_o = w_out.shape
    assert V_e == V and V_o == V and F_o == F

    # Stream activations at the weight precision (cast once here, not per-tile inside
    # the kernel).
    w_dtype = w_emb.dtype
    w_out = w_out.astype(w_dtype)
    x = x.astype(w_dtype)

    # ---- tile sizes: as large as a conservative all-generation VMEM budget allows ----
    tv = max(128, min(_round_up(tv, 128), _round_up(V, 128)))
    tb = max(8, min(_round_up(tb, 8), _round_up(B, 8)))
    # Keep >= 2 batch tiles when the batch allows (cheap here; keeps a v7x
    # batch-parallel variant of this kernel viable).
    if B >= 16:
        tb = min(tb, max(8, _round_up((B + 1) // 2, 8)))

    x_isz = jnp.dtype(w_dtype).itemsize
    o_isz = jnp.dtype(out_dtype).itemsize

    def footprint(tb_, tv_):
        bt_ = _round_up(B, tb_) // tb_
        return (2 * tb_ * tv_ * x_isz            # x tile (double-buffered)
                + 2 * F * tv_ * x_isz            # W_emb tile
                + 2 * tv_ * F * x_isz            # W_out tile
                + 2 * tb_ * tv_ * o_isz          # out tile
                + bt_ * tb_ * F * (4 + x_isz))   # hidden f32 + hidden (w dtype) scratch

    while footprint(tb, tv) > vmem_budget_bytes and tv > 128:
        tv = max(128, _round_up(tv // 2, 128))
    while footprint(tb, tv) > vmem_budget_bytes and tb > 8:
        tb = max(8, _round_up(tb // 2, 8))
    # TODO(synk): if batch is so large that the (Bp, F) hidden scratch alone exceeds
    # VMEM, chunk the batch over multiple pallas_call invocations in the caller.

    Bp, Vp = _round_up(B, tb), _round_up(V, tv)
    if Bp != B or Vp != V:
        x = jnp.pad(x, ((0, Bp - B), (0, Vp - V)))
    if Vp != V:
        w_emb = jnp.pad(w_emb, ((0, 0), (0, Vp - V)))
        w_out = jnp.pad(w_out, ((0, Vp - V), (0, 0)))

    kt = Vp // tv          # vocab K-tiles == vocab N-tiles
    bt = Bp // tb          # batch tiles
    grid = (2 * kt, bt)    # vocab-outer (two phases), batch-inner

    # Index maps.  Arrays unused in a phase are pinned to the last-fetched block so
    # Pallas issues no redundant DMA; the output index is pinned during phase 1 so the
    # unwritten output buffer is never flushed to HBM.
    x_map = lambda s, i: (jnp.where(s < kt, i, bt - 1), jnp.minimum(s, kt - 1))
    we_map = lambda s, i: (0, jnp.minimum(s, kt - 1))
    wo_map = lambda s, i: (jnp.maximum(s - kt, 0), 0)
    o_map = lambda s, i: (jnp.where(s < kt, 0, i), jnp.maximum(s - kt, 0))

    # Honest traffic estimate: every array crosses HBM exactly once under this grid.
    cost = pl.CostEstimate(
        flops=4 * Bp * Vp * F,                 # two GEMMs, 2*B*V*F flops each
        transcendentals=0,
        bytes_accessed=(Bp * Vp * x_isz        # x read once
                        + F * Vp * x_isz       # W_emb read once
                        + Vp * F * x_isz       # W_out read once
                        + Bp * Vp * o_isz),    # out written once
    )

    out = pl.pallas_call(
        functools.partial(_word2vec_kernel, kt=kt),
        out_shape=jax.ShapeDtypeStruct((Bp, Vp), out_dtype),
        grid_spec=pltpu.PrefetchScalarGridSpec(
            num_scalar_prefetch=0,
            grid=grid,
            in_specs=[
                pl.BlockSpec((tb, tv), x_map),    # x: one K-tile per phase-1 step
                pl.BlockSpec((F, tv), we_map),    # W_emb: one K-tile per outer step
                pl.BlockSpec((tv, F), wo_map),    # W_out: one N-tile per phase-2 step
            ],
            out_specs=pl.BlockSpec((tb, tv), o_map),
            scratch_shapes=[
                pltpu.VMEM((bt, tb, F), jnp.float32),  # f32 hidden accumulators
                pltpu.VMEM((bt, tb, F), w_dtype),      # hoisted low-precision hidden
            ],
        ),
        compiler_params=pltpu.CompilerParams(
            # Both axes run in order: the vocab-outer axis carries the hidden
            # accumulator, and the serial batch-inner axis is what lets every weight
            # tile be DMA'd exactly once.  The kernel is HBM-bound at F=128, so this
            # beats megacore batch-sharding (which would double weight reads on v7x).
            dimension_semantics=("arbitrary", "arbitrary"),
            # No vmem_limit_bytes: tiles are sized to sit well under every
            # generation's default scoped VMEM (v5e 16 MiB, v6e/v7x 32 MiB).
        ),
        cost_estimate=cost,
    )(x, w_emb, w_out)

    if Bp != B or Vp != V:
        out = out[:B, :V]
    return out


if __name__ == "__main__":
    def _rel_err(a, b):
        return float(jnp.max(jnp.abs(a - b)) / (jnp.max(jnp.abs(b)) + 1e-6))

    k1, k2, k3, k4, k5, k6 = jax.random.split(jax.random.PRNGKey(0), 6)

    # ---- Test 1: multi-tile grid (4 K-tiles, 4 N-tiles, 4 batch tiles), no padding ----
    vocab, features, batch = 1024, 128, 256
    # nn.init.normal_ -> standard-normal weights in their native Linear layouts;
    # bf16 copies feed the kernel (halves weight/activation HBM traffic, bf16 MXU path),
    # accumulation inside the kernel stays f32.
    w_emb_f32 = jax.random.normal(k1, (features, vocab), dtype=jnp.float32)
    w_out_f32 = jax.random.normal(k2, (vocab, features), dtype=jnp.float32)
    w_emb = w_emb_f32.astype(jnp.bfloat16)
    w_out = w_out_f32.astype(jnp.bfloat16)
    x = jax.random.normal(k3, (batch, vocab), dtype=jnp.float32)

    # Small tiles to exercise the two-phase multi-tile grid at demo scale; production
    # callers keep the larger defaults (tb=256, tv=2048).
    out = word2vec_forward(x, w_emb, w_out, tb=64, tv=256)
    out = jax.block_until_ready(out)
    assert out.shape == (batch, vocab)

    # Reference with the same bf16-operand / f32-accumulation recipe.  Compare with
    # norm-relative tolerances: bf16 rounding of the ~N(0, vocab) hidden state makes
    # tiny elementwise-atol checks meaningless for near-zero logits.
    xb = x.astype(jnp.bfloat16)
    hid = jnp.dot(xb, w_emb.T, preferred_element_type=jnp.float32)
    ref = jnp.dot(hid.astype(jnp.bfloat16), w_out.T, preferred_element_type=jnp.float32)
    ref_f32 = (x @ w_emb_f32.T) @ w_out_f32.T
    assert _rel_err(out, ref) < 2e-2, _rel_err(out, ref)
    assert _rel_err(out, ref_f32) < 5e-2, _rel_err(out, ref_f32)

    # ---- Test 2: ragged shapes exercising batch- and vocab-padding ----
    vocab2, features2, batch2 = 384, 128, 72
    w_emb2_f32 = jax.random.normal(k4, (features2, vocab2), dtype=jnp.float32)
    w_out2_f32 = jax.random.normal(k5, (vocab2, features2), dtype=jnp.float32)
    w_emb2 = w_emb2_f32.astype(jnp.bfloat16)
    w_out2 = w_out2_f32.astype(jnp.bfloat16)
    x2 = jax.random.normal(k6, (batch2, vocab2), dtype=jnp.float32)

    out2 = jax.block_until_ready(word2vec_forward(x2, w_emb2, w_out2, tv=256))
    assert out2.shape == (batch2, vocab2)
    hid2 = jnp.dot(x2.astype(jnp.bfloat16), w_emb2.T, preferred_element_type=jnp.float32)
    ref2 = jnp.dot(hid2.astype(jnp.bfloat16), w_out2.T,
                   preferred_element_type=jnp.float32)
    assert _rel_err(out2, ref2) < 2e-2, _rel_err(out2, ref2)

    # TODO(synk): printWeights()/initLayers()/similarity() are host-side utilities,
    # not part of forward(); they are intentionally not kernelized.
    print("KERNEL_OK")
</pallas_src>

<mosaic_0001>
module attributes {stable_mosaic.version = 11 : i64} {
  func.func @_word2vec_kernel(%arg0: i32, %arg1: i32, %arg2: memref<64x256xbf16, #tpu.memory_space<vmem>>, %arg3: memref<128x256xbf16, #tpu.memory_space<vmem>>, %arg4: memref<256x128xbf16, #tpu.memory_space<vmem>>, %arg5: memref<64x256xf32, #tpu.memory_space<vmem>>, %arg6: memref<4x64x128xf32, #tpu.memory_space<vmem>>, %arg7: memref<4x64x128xbf16, #tpu.memory_space<vmem>>) attributes {dimension_semantics = [#tpu.dimension_semantics<arbitrary>, #tpu.dimension_semantics<arbitrary>], iteration_bounds = array<i64: 8, 4>, scalar_prefetch = 0 : i64, scratch_operands = 2 : i64, tpu.core_type = #tpu.core_type<tc>, window_params = [{transform_indices = @transform_0, window_bounds = array<i64: 64, 256>}, {transform_indices = @transform_1, window_bounds = array<i64: 128, 256>}, {transform_indices = @transform_2, window_bounds = array<i64: 256, 128>}, {transform_indices = @transform_3, window_bounds = array<i64: 64, 256>}]} {
    %c0_i32 = arith.constant 0 : i32
    %0 = arith.cmpi eq, %arg0, %c0_i32 : i32
    %1 = arith.extui %0 : i1 to i32
    %c0_i32_0 = arith.constant 0 : i32
    %2 = arith.cmpi ne, %1, %c0_i32_0 : i32
    scf.if %2 {
      %cst = arith.constant 0.000000e+00 : f32
      %12 = vector.broadcast %cst : f32 to vector<64x128xf32>
      %13 = arith.index_cast %arg1 : i32 to index
      %c0 = arith.constant 0 : index
      %c0_6 = arith.constant 0 : index
      %14 = vector.load %arg6[%13, %c0, %c0_6] : memref<4x64x128xf32, #tpu.memory_space<vmem>>, vector<1x64x128xf32>
      %15 = vector.shape_cast %14 : vector<1x64x128xf32> to vector<64x128xf32>
      %16 = vector.shape_cast %12 : vector<64x128xf32> to vector<1x64x128xf32>
      tpu.vector_store %arg6[%13, %c0, %c0_6], %16 {strides = array<i32>} : memref<4x64x128xf32, #tpu.memory_space<vmem>>, vector<1x64x128xf32>,
    } else {
    }
    %c4_i32 = arith.constant 4 : i32
    %3 = arith.cmpi slt, %arg0, %c4_i32 : i32
    %4 = arith.extui %3 : i1 to i32
    %c0_i32_1 = arith.constant 0 : i32
    %5 = arith.cmpi ne, %4, %c0_i32_1 : i32
    scf.if %5 {
      %12 = arith.index_cast %arg1 : i32 to index
      %c0 = arith.constant 0 : index
      %c0_6 = arith.constant 0 : index
      %13 = vector.load %arg6[%12, %c0, %c0_6] : memref<4x64x128xf32, #tpu.memory_space<vmem>>, vector<1x64x128xf32>
      %14 = vector.shape_cast %13 : vector<1x64x128xf32> to vector<64x128xf32>
      %c0_7 = arith.constant 0 : index
      %c0_8 = arith.constant 0 : index
      %15 = vector.load %arg2[%c0_7, %c0_8] : memref<64x256xbf16, #tpu.memory_space<vmem>>, vector<64x256xbf16>
      %c0_9 = arith.constant 0 : index
      %c0_10 = arith.constant 0 : index
      %16 = vector.load %arg3[%c0_9, %c0_10] : memref<128x256xbf16, #tpu.memory_space<vmem>>, vector<128x256xbf16>
      %cst = arith.constant dense<0.000000e+00> : vector<64x128xf32>
      %17 = tpu.matmul %15, %16, %cst {dimension_numbers = #tpu.dot_dimension_numbers<[1], [1], [0], [0], [0, 0, 1, 0], [], []>} : vector<64x256xbf16>, vector<128x256xbf16>, vector<64x128xf32> -> vector<64x128xf32>
      %18 = arith.addf %14, %17 : vector<64x128xf32>
      %19 = arith.index_cast %arg1 : i32 to index
      %c0_11 = arith.constant 0 : index
      %c0_12 = arith.constant 0 : index
      %20 = vector.load %arg6[%19, %c0_11, %c0_12] : memref<4x64x128xf32, #tpu.memory_space<vmem>>, vector<1x64x128xf32>
      %21 = vector.shape_cast %20 : vector<1x64x128xf32> to vector<64x128xf32>
      %22 = vector.shape_cast %18 : vector<64x128xf32> to vector<1x64x128xf32>
      tpu.vector_store %arg6[%19, %c0_11, %c0_12], %22 {strides = array<i32>} : memref<4x64x128xf32, #tpu.memory_space<vmem>>, vector<1x64x128xf32>,
    } else {
    }
    %c4_i32_2 = arith.constant 4 : i32
    %6 = arith.cmpi eq, %arg0, %c4_i32_2 : i32
    %7 = arith.extui %6 : i1 to i32
    %c0_i32_3 = arith.constant 0 : i32
    %8 = arith.cmpi ne, %7, %c0_i32_3 : i32
    scf.if %8 {
      %12 = arith.index_cast %arg1 : i32 to index
      %c0 = arith.constant 0 : index
      %c0_6 = arith.constant 0 : index
      %13 = vector.load %arg6[%12, %c0, %c0_6] : memref<4x64x128xf32, #tpu.memory_space<vmem>>, vector<1x64x128xf32>
      %14 = vector.shape_cast %13 : vector<1x64x128xf32> to vector<64x128xf32>
      %15 = arith.truncf %14 : vector<64x128xf32> to vector<64x128xbf16>
      %16 = arith.index_cast %arg1 : i32 to index
      %c0_7 = arith.constant 0 : index
      %c0_8 = arith.constant 0 : index
      %17 = vector.load %arg7[%16, %c0_7, %c0_8] : memref<4x64x128xbf16, #tpu.memory_space<vmem>>, vector<1x64x128xbf16>
      %18 = vector.shape_cast %17 : vector<1x64x128xbf16> to vector<64x128xbf16>
      %19 = vector.shape_cast %15 : vector<64x128xbf16> to vector<1x64x128xbf16>
      tpu.vector_store %arg7[%16, %c0_7, %c0_8], %19 {strides = array<i32>} : memref<4x64x128xbf16, #tpu.memory_space<vmem>>, vector<1x64x128xbf16>,
    } else {
    }
    %c4_i32_4 = arith.constant 4 : i32
    %9 = arith.cmpi sge, %arg0, %c4_i32_4 : i32
    %10 = arith.extui %9 : i1 to i32
    %c0_i32_5 = arith.constant 0 : i32
    %11 = arith.cmpi ne, %10, %c0_i32_5 : i32
    scf.if %11 {
      %12 = arith.index_cast %arg1 : i32 to index
      %c0 = arith.constant 0 : index
      %c0_6 = arith.constant 0 : index
      %13 = vector.load %arg7[%12, %c0, %c0_6] : memref<4x64x128xbf16, #tpu.memory_space<vmem>>, vector<1x64x128xbf16>
      %14 = vector.shape_cast %13 : vector<1x64x128xbf16> to vector<64x128xbf16>
      %c0_7 = arith.constant 0 : index
      %c0_8 = arith.constant 0 : index
      %15 = vector.load %arg4[%c0_7, %c0_8] : memref<256x128xbf16, #tpu.memory_space<vmem>>, vector<256x128xbf16>
      %cst = arith.constant dense<0.000000e+00> : vector<64x256xf32>
      %16 = tpu.matmul %14, %15, %cst {dimension_numbers = #tpu.dot_dimension_numbers<[1], [1], [0], [0], [0, 0, 1, 0], [], []>} : vector<64x128xbf16>, vector<256x128xbf16>, vector<64x256xf32> -> vector<64x256xf32>
      %c0_9 = arith.constant 0 : index
      %c0_10 = arith.constant 0 : index
      %17 = vector.load %arg5[%c0_9, %c0_10] : memref<64x256xf32, #tpu.memory_space<vmem>>, vector<64x256xf32>
      tpu.vector_store %arg5[%c0_9, %c0_10], %16 {strides = array<i32>} : memref<64x256xf32, #tpu.memory_space<vmem>>, vector<64x256xf32>,
    } else {
    }
    return
  }
  func.func @transform_0(%arg0: i32, %arg1: i32) -> (i32, i32) {
    %c4_i32 = arith.constant 4 : i32
    %0 = arith.cmpi slt, %arg0, %c4_i32 : i32
    %c3_i32 = arith.constant 3 : i32
    %1 = arith.select %0, %arg1, %c3_i32 : i32
    %c3_i32_0 = arith.constant 3 : i32
    %2 = arith.minsi %arg0, %c3_i32_0 : i32
    %c0_i32 = arith.constant 0 : i32
    return %1, %2 : i32, i32
  }
  func.func @transform_1(%arg0: i32, %arg1: i32) -> (i32, i32) {
    %c3_i32 = arith.constant 3 : i32
    %0 = arith.minsi %arg0, %c3_i32 : i32
    %c0_i32 = arith.constant 0 : i32
    %c0_i32_0 = arith.constant 0 : i32
    return %c0_i32, %0 : i32, i32
  }
  func.func @transform_2(%arg0: i32, %arg1: i32) -> (i32, i32) {
    %c4_i32 = arith.constant 4 : i32
    %0 = arith.subi %arg0, %c4_i32 : i32
    %c0_i32 = arith.constant 0 : i32
    %1 = arith.maxsi %0, %c0_i32 : i32
    %c0_i32_0 = arith.constant 0 : i32
    %c0_i32_1 = arith.constant 0 : i32
    return %1, %c0_i32_0 : i32, i32
  }
  func.func @transform_3(%arg0: i32, %arg1: i32) -> (i32, i32) {
    %c4_i32 = arith.constant 4 : i32
    %0 = arith.cmpi slt, %arg0, %c4_i32 : i32
    %c0_i32 = arith.constant 0 : i32
    %1 = arith.select %0, %c0_i32, %arg1 : i32
    %c4_i32_0 = arith.constant 4 : i32
    %2 = arith.subi %arg0, %c4_i32_0 : i32
    %c0_i32_1 = arith.constant 0 : i32
    %3 = arith.maxsi %2, %c0_i32_1 : i32
    %c0_i32_2 = arith.constant 0 : i32
    return %1, %3 : i32, i32
  }
}

</mosaic_0001>

<llo_original>
// kernel: tpu_custom_call.1
$region0: #{tpu_custom_call.1}
  #allocation0 [shape = 'u32[]', space=smem, size = 0x4, offset = 0x4, fixed_abs, tag = 'smem constant byte address 0x4 - core index']
  #allocation1 [shape = 'u32[144,128]{1,0:T(1,128)}', space=vmem, size = 0x12000, scoped, tag = 'internal scratch']
  #allocation2 [shape = 'f32[4,64,128]{2,1,0:T(8,128)}', space=vmem, size = 0x20000, scoped, tag = 'scratch operand']
  #allocation3 [shape = 'bf16[4,64,128]{2,1,0:T(8,128)(2,1)}', space=vmem, size = 0x10000, scoped, tag = 'scratch operand']
  %s0 = inlined_call_operand.hbm [shape: bf16[256,1024], index: 0, kind: input, shape index: {}]
  %s1 = inlined_call_operand.hbm [shape: bf16[128,1024], index: 1, kind: input, shape index: {}]
  %s2 = inlined_call_operand.hbm [shape: bf16[1024,128], index: 2, kind: input, shape index: {}]
  %s3 = inlined_call_operand.hbm [shape: f32[256,1024], index: 3, kind: output, shape index: {}]
  %s4 = sld [smem:[#allocation0]]
  $region73: #{tpu_custom_call.1} parent=0
    _
  %s6 = ssub.s32 1, %s4
  %s7 = scalar_select 0, %s6, %s4
  $region1: #{tpu_custom_call.1} parent=0
    #allocation4 [shape = 'u8[65536]{0}', space=vmem, size = 0x10000, scoped, tag = 'input window, operand 0']
    #allocation5 [shape = 's32[2]{0}', space=sflag, size = 0x8, scoped, tag = 'scoped memory for tpu_custom_call.1']
    #allocation6 [shape = 's32[2]{0}', space=sflag, size = 0x8, scoped, tag = 'scoped memory for tpu_custom_call.1']
    #allocation7 [shape = 'u8[131072]{0}', space=vmem, size = 0x20000, scoped, tag = 'input window, operand 1']
    #allocation8 [shape = 's32[2]{0}', space=sflag, size = 0x8, scoped, tag = 'scoped memory for tpu_custom_call.1']
    #allocation9 [shape = 'u8[131072]{0}', space=vmem, size = 0x20000, scoped, tag = 'input window, operand 2']
    #allocation10 [shape = 'u8[131072]{0}', space=vmem, size = 0x20000, scoped, tag = 'output window, operand 0']
    %8 = vsyncpa [#allocation5], 0
    %s9 = scalar_lea.sflag [#allocation5], 1
    %10 = vsyncpa %s9, 0
    %11 = vsyncpa [#allocation8], 0
    %s12 = scalar_lea.sflag [#allocation8], 1
    %13 = vsyncpa %s12, 0
    %14 = vsyncpa [#allocation6], 0
    %s15 = scalar_lea.sflag [#allocation6], 1
    %16 = vsyncpa %s15, 0
    loop: start=0, step=1, limit=34
    $region2: #{tpu_custom_call.1} parent=1 // loop_pre_header
      _
    $region3: #{tpu_custom_call.1} parent=1 // loop_header
      %s18 = sphi 0, %s22
      %p19 = scmp.ge.s32.totalorder %s18, 34
      %s25 = sphi 0, %s37
      %s26 = sphi 0, %s33
      %s27 = sphi 0, %s25
      %s28 = sphi 0, %s26
      %s29 = sphi 0, %s27
      %s30 = sphi 0, %s28
      %s50 = sphi 0, %s52
      %s53 = sphi 0, %s50
      %s54 = sphi 0, %s53
      %s70 = sphi 0, %s54
      %s80 = sphi 0, %s82
      %s83 = sphi 0, %s80
      %s84 = sphi 0, %s83
      %s100 = sphi 0, %s84
      %s112 = sphi 0, %s114
      %s115 = sphi 0, %s112
      %s116 = sphi 0, %s115
      %s132 = sphi 0, %s116
      %s150 = sphi 0, %s152
      %s153 = sphi 0, %s150
      %s154 = sphi 0, %s153
      %s170 = sphi 0, %s154
    $region4: #{tpu_custom_call.1} parent=1 // loop_header_branch
      %21 = sbr.rel (%p19) target = $region8
    $region5: #{tpu_custom_call.1} parent=1 // loop_body
      %s23 = ssub.s32 %s18, 1
      %s24 = ssub.s32 %s18, 2
      %s31 = sadd.s32 1, %s26
      %p32 = scmp.ge.s32.totalorder %s31, 4
      %s33 = scalar_select %p32, 0, %s31
      %s34 = sadd.s32 1, %s25
      %s35 = scalar_select %p32, %s34, %s25
      %p36 = scmp.ge.s32.totalorder %s35, 8
      %s37 = scalar_select %p36, 0, %s35
      %p38 = scmp.lt.s32.totalorder %s25, 4
      %s39 = scalar_select %p38, %s26, 3
      %p40 = scmp.lt.s32.totalorder %s25, 3
      %s41 = scalar_select %p40, %s25, 3
      %p42 = scmp.lt.s32.totalorder %s37, 4
      %s43 = scalar_select %p42, %s33, 3
      %p44 = scmp.lt.s32.totalorder %s37, 3
      %s45 = scalar_select %p44, %s37, 3
      %s46 = ssub.s32 %s39, %s43
      %s47 = ssub.s32 %s41, %s45
      %s48 = sor.u32 %s46, %s47
      %p49 = scmp.eq.s32.totalorder %s48, 0
      %s51 = sadd.s32 %s50, 1
      %s52 = scalar_select %p49, %s50, %s51
      %p55 = pneg %p49
      %p56 = scmp.eq.s32.totalorder %s18, 31
      %p57 = por %p55, %p56
      %p58 = scmp.ne.s32.totalorder %s50, %s53
      %p59 = scmp.eq.s32.totalorder %s18, 0
      %p60 = por %p58, %p59
      %p61 = scmp.ne.s32.totalorder %s50, %s53
      %p62 = scmp.eq.s32.totalorder %s23, 31
      %p63 = por %p61, %p62
      %p64 = scmp.ne.s32.totalorder %s53, %s54
      %p65 = scmp.eq.s32.totalorder %s23, 0
      %p66 = por %p64, %p65
      %p67 = scmp.ne.s32.totalorder %s53, %s54
      %p68 = scmp.eq.s32.totalorder %s24, 31
      %p69 = por %p67, %p68
      %p71 = scmp.ne.s32.totalorder %s54, %s70
      %p72 = scmp.eq.s32.totalorder %s24, 0
      %p73 = por %p71, %p72
      %p74 = scmp.lt.s32.totalorder %s25, 3
      %s75 = scalar_select %p74, %s25, 3
      %p76 = scmp.lt.s32.totalorder %s37, 3
      %s77 = scalar_select %p76, %s37, 3
      %s78 = ssub.s32 %s75, %s77
      %p79 = scmp.eq.s32.totalorder %s78, 0
      %s81 = sadd.s32 %s80, 1
      %s82 = scalar_select %p79, %s80, %s81
      %p85 = pneg %p79
      %p86 = scmp.eq.s32.totalorder %s18, 31
      %p87 = por %p85, %p86
      %p88 = scmp.ne.s32.totalorder %s80, %s83
      %p89 = scmp.eq.s32.totalorder %s18, 0
      %p90 = por %p88, %p89
      %p91 = scmp.ne.s32.totalorder %s80, %s83
      %p92 = scmp.eq.s32.totalorder %s23, 31
      %p93 = por %p91, %p92
      %p94 = scmp.ne.s32.totalorder %s83, %s84
      %p95 = scmp.eq.s32.totalorder %s23, 0
      %p96 = por %p94, %p95
      %p97 = scmp.ne.s32.totalorder %s83, %s84
      %p98 = scmp.eq.s32.totalorder %s24, 31
      %p99 = por %p97, %p98
      %p101 = scmp.ne.s32.totalorder %s84, %s100
      %p102 = scmp.eq.s32.totalorder %s24, 0
      %p103 = por %p101, %p102
      %s104 = ssub.s32 %s25, 4
      %p105 = scmp.gt.s32.totalorder %s104, 0
      %s106 = scalar_select %p105, %s104, 0
      %s107 = ssub.s32 %s37, 4
      %p108 = scmp.gt.s32.totalorder %s107, 0
      %s109 = scalar_select %p108, %s107, 0
      %s110 = ssub.s32 %s106, %s109
      %p111 = scmp.eq.s32.totalorder %s110, 0
      %s113 = sadd.s32 %s112, 1
      %s114 = scalar_select %p111, %s112, %s113
      %p117 = pneg %p111
      %p118 = scmp.eq.s32.totalorder %s18, 31
      %p119 = por %p117, %p118
      %p120 = scmp.ne.s32.totalorder %s112, %s115
      %p121 = scmp.eq.s32.totalorder %s18, 0
      %p122 = por %p120, %p121
      %p123 = scmp.ne.s32.totalorder %s112, %s115
      %p124 = scmp.eq.s32.totalorder %s23, 31
      %p125 = por %p123, %p124
      %p126 = scmp.ne.s32.totalorder %s115, %s116
      %p127 = scmp.eq.s32.totalorder %s23, 0
      %p128 = por %p126, %p127
      %p129 = scmp.ne.s32.totalorder %s115, %s116
      %p130 = scmp.eq.s32.totalorder %s24, 31
      %p131 = por %p129, %p130
      %p133 = scmp.ne.s32.totalorder %s116, %s132
      %p134 = scmp.eq.s32.totalorder %s24, 0
      %p135 = por %p133, %p134
      %p136 = scmp.lt.s32.totalorder %s25, 4
      %s137 = scalar_select %p136, 0, %s26
      %s138 = ssub.s32 %s25, 4
      %p139 = scmp.gt.s32.totalorder %s138, 0
      %s140 = scalar_select %p139, %s138, 0
      %p141 = scmp.lt.s32.totalorder %s37, 4
      %s142 = scalar_select %p141, 0, %s33
      %s143 = ssub.s32 %s37, 4
      %p144 = scmp.gt.s32.totalorder %s143, 0
      %s145 = scalar_select %p144, %s143, 0
      %s146 = ssub.s32 %s137, %s142
      %s147 = ssub.s32 %s140, %s145
      %s148 = sor.u32 %s146, %s147
      %p149 = scmp.eq.s32.totalorder %s148, 0
      %s151 = sadd.s32 %s150, 1
      %s152 = scalar_select %p149, %s150, %s151
      %p155 = pneg %p149
      %p156 = scmp.eq.s32.totalorder %s18, 31
      %p157 = por %p155, %p156
      %p158 = scmp.ne.s32.totalorder %s150, %s153
      %p159 = scmp.eq.s32.totalorder %s18, 0
      %p160 = por %p158, %p159
      %p161 = scmp.ne.s32.totalorder %s150, %s153
      %p162 = scmp.eq.s32.totalorder %s23, 31
      %p163 = por %p161, %p162
      %p164 = scmp.ne.s32.totalorder %s153, %s154
      %p165 = scmp.eq.s32.totalorder %s23, 0
      %p166 = por %p164, %p165
      %p167 = scmp.ne.s32.totalorder %s153, %s154
      %p168 = scmp.eq.s32.totalorder %s24, 31
      %p169 = por %p167, %p168
      %p171 = scmp.ne.s32.totalorder %s154, %s170
      %p172 = scmp.eq.s32.totalorder %s24, 0
      %p173 = por %p171, %p172
      %p174 = scmp.le.s32.totalorder 1, %s18
      %p175 = scmp.lt.s32.totalorder %s18, 33
      %p176 = pnand %p174, %p175
      %p177 = pneg %p176
      // Predicated region
      $region9: #{tpu_custom_call.1} parent=5 // pred_check
        _
      $region10: #{tpu_custom_call.1} parent=5 // pred_check_branch
        %179 = sbr.rel (%p176) target = $region12
      $region11: #{tpu_custom_call.1} parent=5 // pred_region
        %s180 = ssub.s32 %s18, 1
      $region12: #{tpu_custom_call.1} parent=5 // pred_fallthru
        _
      %p181 = scmp.lt.s32.totalorder %s18, 32
      // Predicated region
      $region13: #{tpu_custom_call.1} parent=5 // pred_check
        %p182 = pneg %p181
      $region14: #{tpu_custom_call.1} parent=5 // pred_check_branch
        %184 = sbr.rel (%p182) target = $region16
      $region15: #{tpu_custom_call.1} parent=5 // pred_region
        // Predicated region
        $region17: #{tpu_custom_call.1} parent=15 // pred_check
          %p185 = pneg %p60
        $region18: #{tpu_custom_call.1} parent=15 // pred_check_branch
          %187 = sbr.rel (%p185) target = $region20
        $region19: #{tpu_custom_call.1} parent=15 // pred_region
          %s188 = sand.u32 %s50, 1
          %s189 = scalar_lea.sflag [#allocation5], %s188
          %s190 = sand.u32 %s50, 1
          %s191 = smul.addr %s190, 64
          %s192 = scalar_lea.vmem [#allocation4], %s191
          %p193 = scmp.lt.s32.totalorder %s25, 4
          %s194 = scalar_select %p193, %s26, 3
          %p195 = scmp.lt.s32.totalorder %s25, 3
          %s196 = scalar_select %p195, %s25, 3
          %s197 = smul.u32 8, %s194
          %s198 = smul.u32 2, %s196
          %s200 = ssub.s32 1024, 1024
          %201 = vsyncadd %s189, %s200
          %s202 = smul.addr %s197, 8
          %s203 = sadd.s32 %s198, %s202
          %s204 = smul.addr %s203, 64
          %s205 = scalar_lea.hbm %s0, %s204
          %s206 = sshll.u32 %s192, 4
          %s207 = int_to_ptr.vmem [resolvable:$true] %s206
          %212 = dma.hbm_to_vmem [thread:$0]  %s205, 1024, %s207, %s189, 512, 128, 8
        $region20: #{tpu_custom_call.1} parent=15 // pred_fallthru
          _
        // Predicated region
        $region21: #{tpu_custom_call.1} parent=15 // pred_check
          %p213 = pneg %p90
        $region22: #{tpu_custom_call.1} parent=15 // pred_check_branch
          %215 = sbr.rel (%p213) target = $region24
        $region23: #{tpu_custom_call.1} parent=15 // pred_region
          %s216 = sand.u32 %s18, 1
          %s217 = scalar_lea.sflag [#allocation8], %s216
          %s218 = sand.u32 %s80, 1
          %s219 = smul.addr %s218, 128
          %s220 = scalar_lea.vmem [#allocation7], %s219
          %p221 = scmp.lt.s32.totalorder %s25, 3
          %s222 = scalar_select %p221, %s25, 3
          %s223 = smul.u32 2, %s222
          %s225 = ssub.s32 2048, 2048
          %226 = vsyncadd %s217, %s225
          %s227 = smul.addr %s223, 64
          %s228 = scalar_lea.hbm %s1, %s227
          %s229 = sshll.u32 %s220, 4
          %s230 = int_to_ptr.vmem [resolvable:$true] %s229
          %235 = dma.hbm_to_vmem [thread:$0]  %s228, 2048, %s230, %s217, 512, 128, 8
        $region24: #{tpu_custom_call.1} parent=15 // pred_fallthru
          _
        // Predicated region
        $region25: #{tpu_custom_call.1} parent=15 // pred_check
          %p236 = pneg %p122
        $region26: #{tpu_custom_call.1} parent=15 // pred_check_branch
          %238 = sbr.rel (%p236) target = $region28
        $region27: #{tpu_custom_call.1} parent=15 // pred_region
          %s239 = sand.u32 %s18, 1
          %s240 = scalar_lea.sflag [#allocation8], %s239
          %s241 = sand.u32 %s112, 1
          %s242 = smul.addr %s241, 128
          %s243 = scalar_lea.vmem [#allocation9], %s242
          %s244 = ssub.s32 %s25, 4
          %p245 = scmp.gt.s32.totalorder %s244, 0
          %s246 = scalar_select %p245, %s244, 0
          %s247 = smul.u32 32, %s246
          %s249 = ssub.s32 2048, 2048
          %250 = vsyncadd %s240, %s249
          %s251 = smul.addr %s247, 64
          %s252 = scalar_lea.hbm %s2, %s251
          %s253 = sshll.u32 %s243, 4
          %s254 = int_to_ptr.vmem [resolvable:$true] %s253
          %259 = dma.hbm_to_vmem [thread:$0]  %s252, 2048, %s254, %s240, 64, 64, 4
        $region28: #{tpu_custom_call.1} parent=15 // pred_fallthru
          _
      $region16: #{tpu_custom_call.1} parent=5 // pred_fallthru
        _
      %p260 = scmp.le.s32.totalorder 1, %s18
      %p261 = scmp.lt.s32.totalorder %s18, 33
      %p262 = pnand %p260, %p261
      %p263 = pneg %p262
      // Predicated region
      $region29: #{tpu_custom_call.1} parent=5 // pred_check
        _
      $region30: #{tpu_custom_call.1} parent=5 // pred_check_branch
        %265 = sbr.rel (%p262) target = $region32
      $region31: #{tpu_custom_call.1} parent=5 // pred_region
        %s266 = ssub.s32 %s18, 1
        %s267 = sand.u32 %s53, 1
        %s268 = scalar_lea.sflag [#allocation5], %s267
        %s269 = sand.u32 %s53, 1
        %s270 = smul.addr %s269, 64
        %s271 = scalar_lea.vmem [#allocation4], %s270
        // Predicated region
        $region33: #{tpu_custom_call.1} parent=31 // pred_check
          %p272 = pneg %p66
        $region34: #{tpu_custom_call.1} parent=31 // pred_check_branch
          %274 = sbr.rel (%p272) target = $region36
        $region35: #{tpu_custom_call.1} parent=31 // pred_region
          %275 = dma.done %s268, 1024
        $region36: #{tpu_custom_call.1} parent=31 // pred_fallthru
          _
        %s276 = sand.u32 %s23, 1
        %s277 = scalar_lea.sflag [#allocation8], %s276
        %s278 = sand.u32 %s83, 1
        %s279 = smul.addr %s278, 128
        %s280 = scalar_lea.vmem [#allocation7], %s279
        // Predicated region
        $region37: #{tpu_custom_call.1} parent=31 // pred_check
          %p281 = pneg %p96
        $region38: #{tpu_custom_call.1} parent=31 // pred_check_branch
          %283 = sbr.rel (%p281) target = $region40
        $region39: #{tpu_custom_call.1} parent=31 // pred_region
          %284 = dma.done %s277, 2048
        $region40: #{tpu_custom_call.1} parent=31 // pred_fallthru
          _
        %s285 = sand.u32 %s23, 1
        %s286 = scalar_lea.sflag [#allocation8], %s285
        %s287 = sand.u32 %s115, 1
        %s288 = smul.addr %s287, 128
        %s289 = scalar_lea.vmem [#allocation9], %s288
        // Predicated region
        $region41: #{tpu_custom_call.1} parent=31 // pred_check
          %p290 = pneg %p128
        $region42: #{tpu_custom_call.1} parent=31 // pred_check_branch
          %292 = sbr.rel (%p290) target = $region44
        $region43: #{tpu_custom_call.1} parent=31 // pred_region
          %293 = dma.done %s286, 2048
        $region44: #{tpu_custom_call.1} parent=31 // pred_fallthru
          _
        %s294 = sand.u32 %s53, 1
        %s295 = scalar_lea.sflag [#allocation5], %s294
        %s296 = sand.u32 %s53, 1
        %s297 = smul.addr %s296, 64
        %s298 = scalar_lea.vmem [#allocation4], %s297
        %p299 = pneg %p66
        %p300 = pneg %p63
        %s301 = sand.u32 %s23, 1
        %s302 = scalar_lea.sflag [#allocation8], %s301
        %s303 = sand.u32 %s83, 1
        %s304 = smul.addr %s303, 128
        %s305 = scalar_lea.vmem [#allocation7], %s304
        %p306 = pneg %p96
        %p307 = pneg %p93
        %s308 = sand.u32 %s23, 1
        %s309 = scalar_lea.sflag [#allocation8], %s308
        %s310 = sand.u32 %s115, 1
        %s311 = smul.addr %s310, 128
        %s312 = scalar_lea.vmem [#allocation9], %s311
        %p313 = pneg %p128
        %p314 = pneg %p125
        %p315 = pneg %p166
        %p316 = pneg %p163
        %s317 = sand.u32 %s153, 1
        %s318 = scalar_lea.sflag [#allocation6], %s317
        %s319 = sand.u32 %s153, 1
        %s320 = smul.addr %s319, 128
        %s321 = scalar_lea.vmem [#allocation10], %s320
        %p322 = scmp.lt.s32.totalorder %s27, 4
        %s323 = scalar_select %p322, %s28, 3
        %p324 = scmp.lt.s32.totalorder %s27, 3
        %s325 = scalar_select %p324, %s27, 3
        %s326 = smul.u32 8, %s323
        %s327 = smul.u32 2, %s325
        %p328 = scmp.lt.s32.totalorder %s27, 3
        %s329 = scalar_select %p328, %s27, 3
        %s330 = smul.u32 2, %s329
        %s331 = ssub.s32 %s27, 4
        %p332 = scmp.gt.s32.totalorder %s331, 0
        %s333 = scalar_select %p332, %s331, 0
        %s334 = smul.u32 32, %s333
        %p335 = scmp.lt.s32.totalorder %s27, 4
        %s336 = scalar_select %p335, 0, %s28
        %s337 = ssub.s32 %s27, 4
        %p338 = scmp.gt.s32.totalorder %s337, 0
        %s339 = scalar_select %p338, %s337, 0
        %s340 = smul.u32 8, %s336
        %s341 = smul.u32 2, %s339
        %p343 = scmp.eq.s32.totalorder %s27, 0
        // Predicated region
        $region45: #{tpu_custom_call.1} parent=31 // pred_check
          %p344 = pneg %p343
        $region46: #{tpu_custom_call.1} parent=31 // pred_check_branch
          %346 = sbr.rel (%p344) target = $region48
        $region47: #{tpu_custom_call.1} parent=31 // pred_region
          %s347 = smul.u32 %s28, 64
          %s348 = scalar_lea.vmem [#allocation2], %s347
          %349 = vst [vmem:[%s348] sm:$0xff] 0.0
          %350 = vst [vmem:[%s348 + $0x8] sm:$0xff] 0.0
          %351 = vst [vmem:[%s348 + $0x10] sm:$0xff] 0.0
          %352 = vst [vmem:[%s348 + $0x18] sm:$0xff] 0.0
          %353 = vst [vmem:[%s348 + $0x20] sm:$0xff] 0.0
          %354 = vst [vmem:[%s348 + $0x28] sm:$0xff] 0.0
          %355 = vst [vmem:[%s348 + $0x30] sm:$0xff] 0.0
          %356 = vst [vmem:[%s348 + $0x38] sm:$0xff] 0.0
        $region48: #{tpu_custom_call.1} parent=31 // pred_fallthru
          _
        %p357 = scmp.lt.s32.totalorder %s27, 4
        // Predicated region
        $region49: #{tpu_custom_call.1} parent=31 // pred_check
          %p358 = pneg %p357
        $region50: #{tpu_custom_call.1} parent=31 // pred_check_branch
          %360 = sbr.rel (%p358) target = $region52
        $region51: #{tpu_custom_call.1} parent=31 // pred_region
          %s361 = smul.u32 %s28, 64
          %s362 = scalar_lea.vmem [#allocation2], %s361
          %v363 = vld [vmem:[%s362] sm:$0xff]
          %v364 = vld [vmem:[%s362 + $0x8] sm:$0xff]
          %v365 = vld [vmem:[%s362 + $0x10] sm:$0xff]
          %v366 = vld [vmem:[%s362 + $0x18] sm:$0xff]
          %v367 = vld [vmem:[%s362 + $0x20] sm:$0xff]
          %v368 = vld [vmem:[%s362 + $0x28] sm:$0xff]
          %v369 = vld [vmem:[%s362 + $0x30] sm:$0xff]
          %v370 = vld [vmem:[%s362 + $0x38] sm:$0xff]
          %v371 = vld [vmem:[%s271] sm:$0xff]
          %v372 = vld [vmem:[%s271 + $0x8] sm:$0xff]
          %v373 = vld [vmem:[%s271 + $0x10] sm:$0xff]
          %v374 = vld [vmem:[%s271 + $0x18] sm:$0xff]
          %v375 = vld [vmem:[%s271 + $0x20] sm:$0xff]
          %v376 = vld [vmem:[%s271 + $0x28] sm:$0xff]
          %v377 = vld [vmem:[%s271 + $0x30] sm:$0xff]
          %v378 = vld [vmem:[%s271 + $0x38] sm:$0xff]
          %v379 = vld [vmem:[%s280] sm:$0xff]
          %v380 = vld [vmem:[%s280 + $0x8] sm:$0xff]
          %v381 = vld [vmem:[%s280 + $0x10] sm:$0xff]
          %v382 = vld [vmem:[%s280 + $0x18] sm:$0xff]
          %v383 = vld [vmem:[%s280 + $0x20] sm:$0xff]
          %v384 = vld [vmem:[%s280 + $0x28] sm:$0xff]
          %v385 = vld [vmem:[%s280 + $0x30] sm:$0xff]
          %v386 = vld [vmem:[%s280 + $0x38] sm:$0xff]
          %v387 = vld [vmem:[%s280 + $0x40] sm:$0xff]
          %v388 = vld [vmem:[%s280 + $0x48] sm:$0xff]
          %v389 = vld [vmem:[%s280 + $0x50] sm:$0xff]
          %v390 = vld [vmem:[%s280 + $0x58] sm:$0xff]
          %v391 = vld [vmem:[%s280 + $0x60] sm:$0xff]
          %v392 = vld [vmem:[%s280 + $0x68] sm:$0xff]
          %v393 = vld [vmem:[%s280 + $0x70] sm:$0xff]
          %v394 = vld [vmem:[%s280 + $0x78] sm:$0xff]
          %v403 = vunpack.c.l.b16 %v371
          %v404 = vunpack.c.h.b16 %v371
          %v405 = vunpack.c.l.b16 %v372
          %v406 = vunpack.c.h.b16 %v372
          %v407 = vunpack.c.l.b16 %v373
          %v408 = vunpack.c.h.b16 %v373
          %v409 = vunpack.c.l.b16 %v374
          %v410 = vunpack.c.h.b16 %v374
          %v411 = vunpack.c.l.b16 %v375
          %v412 = vunpack.c.h.b16 %v375
          %v413 = vunpack.c.l.b16 %v376
          %v414 = vunpack.c.h.b16 %v376
          %v415 = vunpack.c.l.b16 %v377
          %v416 = vunpack.c.h.b16 %v377
          %v417 = vunpack.c.l.b16 %v378
          %v418 = vunpack.c.h.b16 %v378
          %v419 = vpack.c.b16 %v405, %v403
          %v420 = vpack.c.b16 %v406, %v404
          %v421 = vpack.c.b16 %v409, %v407
          %v422 = vpack.c.b16 %v410, %v408
          %v423 = vpack.c.b16 %v413, %v411
          %v424 = vpack.c.b16 %v414, %v412
          %v425 = vpack.c.b16 %v417, %v415
          %v426 = vpack.c.b16 %v418, %v416
          %v451 = vunpack.c.l.b16 %v379
          %v452 = vunpack.c.h.b16 %v379
          %v453 = vunpack.c.l.b16 %v380
          %v454 = vunpack.c.h.b16 %v380
          %v455 = vunpack.c.l.b16 %v381
          %v456 = vunpack.c.h.b16 %v381
          %v457 = vunpack.c.l.b16 %v382
          %v458 = vunpack.c.h.b16 %v382
          %v459 = vunpack.c.l.b16 %v383
          %v460 = vunpack.c.h.b16 %v383
          %v461 = vunpack.c.l.b16 %v384
          %v462 = vunpack.c.h.b16 %v384
          %v463 = vunpack.c.l.b16 %v385
          %v464 = vunpack.c.h.b16 %v385
          %v465 = vunpack.c.l.b16 %v386
          %v466 = vunpack.c.h.b16 %v386
          %v467 = vunpack.c.l.b16 %v387
          %v468 = vunpack.c.h.b16 %v387
          %v469 = vunpack.c.l.b16 %v388
          %v470 = vunpack.c.h.b16 %v388
          %v471 = vunpack.c.l.b16 %v389
          %v472 = vunpack.c.h.b16 %v389
          %v473 = vunpack.c.l.b16 %v390
          %v474 = vunpack.c.h.b16 %v390
          %v475 = vunpack.c.l.b16 %v391
          %v476 = vunpack.c.h.b16 %v391
          %v477 = vunpack.c.l.b16 %v392
          %v478 = vunpack.c.h.b16 %v392
          %v479 = vunpack.c.l.b16 %v393
          %v480 = vunpack.c.h.b16 %v393
          %v481 = vunpack.c.l.b16 %v394
          %v482 = vunpack.c.h.b16 %v394
          %v483 = vpack.c.b16 %v453, %v451
          %v484 = vpack.c.b16 %v454, %v452
          %v485 = vpack.c.b16 %v457, %v455
          %v486 = vpack.c.b16 %v458, %v456
          %v487 = vpack.c.b16 %v461, %v459
          %v488 = vpack.c.b16 %v462, %v460
          %v489 = vpack.c.b16 %v465, %v463
          %v490 = vpack.c.b16 %v466, %v464
          %v491 = vpack.c.b16 %v469, %v467
          %v492 = vpack.c.b16 %v470, %v468
          %v493 = vpack.c.b16 %v473, %v471
          %v494 = vpack.c.b16 %v474, %v472
          %v495 = vpack.c.b16 %v477, %v475
          %v496 = vpack.c.b16 %v478, %v476
          %v497 = vpack.c.b16 %v481, %v479
          %v498 = vpack.c.b16 %v482, %v480
          %515 = vmatprep.subr.bf16.mxu0 %v498
          %516 = vmatpush1.bf16.xpose.msra.mxu0 %v497
          %517 = vmatprep.subr.bf16.mxu0 %v496
          %518 = vmatpush1.bf16.xpose.msra.mxu0 %v495
          %519 = vmatprep.subr.bf16.mxu0 %v494
          %520 = vmatpush1.bf16.xpose.msra.mxu0 %v493
          %521 = vmatprep.subr.bf16.mxu0 %v492
          %522 = vmatpush1.bf16.xpose.msra.mxu0 %v491
          %523 = vmatprep.subr.bf16.mxu0 %v490
          %524 = vmatpush1.bf16.xpose.msra.mxu0 %v489
          %525 = vmatprep.subr.bf16.mxu0 %v488
          %526 = vmatpush1.bf16.xpose.msra.mxu0 %v487
          %527 = vmatprep.subr.bf16.mxu0 %v486
          %528 = vmatpush1.bf16.xpose.msra.mxu0 %v485
          %529 = vmatprep.subr.bf16.mxu0 %v484
          %530 = vmatpush1.bf16.xpose.msra.mxu0 %v483
          %531 = vmatprep.subr.bf16.mxu0 0
          %532 = vmatpush2.bf16.xpose.msra.mxu0 0
          %533 = vmatprep.subr.bf16.mxu0 0
          %534 = vmatpush2.bf16.xpose.msra.mxu0 0
          %535 = vmatprep.subr.bf16.mxu0 0
          %536 = vmatpush2.bf16.xpose.msra.mxu0 0
          %537 = vmatprep.subr.bf16.mxu0 0
          %538 = vmatpush2.bf16.xpose.msra.mxu0 0
          %539 = vmatprep.subr.bf16.mxu0 0
          %540 = vmatpush2.bf16.xpose.msra.mxu0 0
          %541 = vmatprep.subr.bf16.mxu0 0
          %542 = vmatpush2.bf16.xpose.msra.mxu0 0
          %543 = vmatprep.subr.bf16.mxu0 0
          %544 = vmatpush2.bf16.xpose.msra.mxu0 0
          %545 = vmatprep.subr.bf16.mxu0 0
          %546 = vmatpush2.bf16.xpose.msra.mxu0 0
          %547 = vmatprep.mubr.bf16.mxu0 %v420
          %548 = vmatmul.mubr.bf16.gmra.mxu0 %v419
          %v549 = vpop.f32.mrf.mxu0
          %v550 = vadd.f32 0.0, %v549
          %v551 = vpop.f32.mrf.mxu0
          %v552 = vpop.f32.mrf.mxu0
          %v553 = vadd.f32 0.0, %v552
          %v554 = vpop.f32.mrf.mxu0
          %555 = vmatprep.mubr.bf16.mxu0 %v422
          %556 = vmatmul.mubr.bf16.gmra.mxu0 %v421
          %v557 = vpop.f32.mrf.mxu0
          %v558 = vadd.f32 0.0, %v557
          %v559 = vpop.f32.mrf.mxu0
          %v560 = vpop.f32.mrf.mxu0
          %v561 = vadd.f32 0.0, %v560
          %v562 = vpop.f32.mrf.mxu0
          %563 = vmatprep.mubr.bf16.mxu0 %v424
          %564 = vmatmul.mubr.bf16.gmra.mxu0 %v423
          %v565 = vpop.f32.mrf.mxu0
          %v566 = vadd.f32 0.0, %v565
          %v567 = vpop.f32.mrf.mxu0
          %v568 = vpop.f32.mrf.mxu0
          %v569 = vadd.f32 0.0, %v568
          %v570 = vpop.f32.mrf.mxu0
          %571 = vmatprep.mubr.bf16.mxu0 %v426
          %572 = vmatmul.mubr.bf16.gmra.mxu0 %v425
          %v573 = vpop.f32.mrf.mxu0
          %v574 = vadd.f32 0.0, %v573
          %v575 = vpop.f32.mrf.mxu0
          %v576 = vpop.f32.mrf.mxu0
          %v577 = vadd.f32 0.0, %v576
          %v578 = vpop.f32.mrf.mxu0
          %579 = vdwg.mxu0
          %v580 = vadd.f32 %v363, %v550
          %v581 = vadd.f32 %v364, %v553
          %v582 = vadd.f32 %v365, %v558
          %v583 = vadd.f32 %v366, %v561
          %v584 = vadd.f32 %v367, %v566
          %v585 = vadd.f32 %v368, %v569
          %v586 = vadd.f32 %v369, %v574
          %v587 = vadd.f32 %v370, %v577
          %588 = vst [vmem:[%s362] sm:$0xff] %v580
          %589 = vst [vmem:[%s362 + $0x8] sm:$0xff] %v581
          %590 = vst [vmem:[%s362 + $0x10] sm:$0xff] %v582
          %591 = vst [vmem:[%s362 + $0x18] sm:$0xff] %v583
          %592 = vst [vmem:[%s362 + $0x20] sm:$0xff] %v584
          %593 = vst [vmem:[%s362 + $0x28] sm:$0xff] %v585
          %594 = vst [vmem:[%s362 + $0x30] sm:$0xff] %v586
          %595 = vst [vmem:[%s362 + $0x38] sm:$0xff] %v587
        $region52: #{tpu_custom_call.1} parent=31 // pred_fallthru
          _
        %p596 = scmp.eq.s32.totalorder %s27, 4
        // Predicated region
        $region53: #{tpu_custom_call.1} parent=31 // pred_check
          %p597 = pneg %p596
        $region54: #{tpu_custom_call.1} parent=31 // pred_check_branch
          %599 = sbr.rel (%p597) target = $region56
        $region55: #{tpu_custom_call.1} parent=31 // pred_region
          %s600 = smul.u32 %s28, 64
          %s601 = scalar_lea.vmem [#allocation2], %s600
          %v602 = vld [vmem:[%s601] sm:$0xff]
          %v603 = vld [vmem:[%s601 + $0x8] sm:$0xff]
          %v604 = vld [vmem:[%s601 + $0x10] sm:$0xff]
          %v605 = vld [vmem:[%s601 + $0x18] sm:$0xff]
          %v606 = vld [vmem:[%s601 + $0x20] sm:$0xff]
          %v607 = vld [vmem:[%s601 + $0x28] sm:$0xff]
          %v608 = vld [vmem:[%s601 + $0x30] sm:$0xff]
          %v609 = vld [vmem:[%s601 + $0x38] sm:$0xff]
          %v610 = vpack.c.bf16 %v603, %v602
          %v611 = vpack.c.bf16 %v605, %v604
          %v612 = vpack.c.bf16 %v607, %v606
          %v613 = vpack.c.bf16 %v609, %v608
          %v618 = vunpack.c.l.b16 %v610
          %v619 = vunpack.c.h.b16 %v610
          %v620 = vunpack.c.l.b16 %v611
          %v621 = vunpack.c.h.b16 %v611
          %v622 = vunpack.c.l.b16 %v612
          %v623 = vunpack.c.h.b16 %v612
          %v624 = vunpack.c.l.b16 %v613
          %v625 = vunpack.c.h.b16 %v613
          %v626 = vpack.c.b16 %v618, %v618
          %v627 = vpack.c.b16 %v619, %v619
          %v628 = vpack.c.b16 %v620, %v620
          %v629 = vpack.c.b16 %v621, %v621
          %v630 = vpack.c.b16 %v622, %v622
          %v631 = vpack.c.b16 %v623, %v623
          %v632 = vpack.c.b16 %v624, %v624
          %v633 = vpack.c.b16 %v625, %v625
          %s642 = smul.u32 %s28, 8
          %s643 = smul.addr %s642, 4
          %s644 = scalar_lea.vmem [#allocation3], %s643
          %645 = vst [vmem:[%s644] sm:$0xf] %v626
          %646 = vst [vmem:[%s644 + $0x4] sm:$0xf] %v627
          %647 = vst [vmem:[%s644 + $0x8] sm:$0xf] %v628
          %648 = vst [vmem:[%s644 + $0xc] sm:$0xf] %v629
          %649 = vst [vmem:[%s644 + $0x10] sm:$0xf] %v630
          %650 = vst [vmem:[%s644 + $0x14] sm:$0xf] %v631
          %651 = vst [vmem:[%s644 + $0x18] sm:$0xf] %v632
          %652 = vst [vmem:[%s644 + $0x1c] sm:$0xf] %v633
        $region56: #{tpu_custom_call.1} parent=31 // pred_fallthru
          _
        %p653 = scmp.ge.s32.totalorder %s27, 4
        // Predicated region
        $region57: #{tpu_custom_call.1} parent=31 // pred_check
          %p654 = pneg %p653
        $region58: #{tpu_custom_call.1} parent=31 // pred_check_branch
          %656 = sbr.rel (%p654) target = $region60
        $region59: #{tpu_custom_call.1} parent=31 // pred_region
          %s657 = smul.u32 %s28, 8
          %s658 = smul.addr %s657, 4
          %s659 = scalar_lea.vmem [#allocation3], %s658
          %v660 = vld [vmem:[%s659] sm:$0xf]
          %v661 = vld [vmem:[%s659 + $0x4] sm:$0xf]
          %v662 = vld [vmem:[%s659 + $0x8] sm:$0xf]
          %v663 = vld [vmem:[%s659 + $0xc] sm:$0xf]
          %v664 = vld [vmem:[%s659 + $0x10] sm:$0xf]
          %v665 = vld [vmem:[%s659 + $0x14] sm:$0xf]
          %v666 = vld [vmem:[%s659 + $0x18] sm:$0xf]
          %v667 = vld [vmem:[%s659 + $0x1c] sm:$0xf]
          %v668 = vld [vmem:[%s289] sm:$0xf]
          %v669 = vld [vmem:[%s289 + $0x4] sm:$0xf]
          %v670 = vld [vmem:[%s289 + $0x8] sm:$0xf]
          %v671 = vld [vmem:[%s289 + $0xc] sm:$0xf]
          %v672 = vld [vmem:[%s289 + $0x10] sm:$0xf]
          %v673 = vld [vmem:[%s289 + $0x14] sm:$0xf]
          %v674 = vld [vmem:[%s289 + $0x18] sm:$0xf]
          %v675 = vld [vmem:[%s289 + $0x1c] sm:$0xf]
          %v676 = vld [vmem:[%s289 + $0x20] sm:$0xf]
          %v677 = vld [vmem:[%s289 + $0x24] sm:$0xf]
          %v678 = vld [vmem:[%s289 + $0x28] sm:$0xf]
          %v679 = vld [vmem:[%s289 + $0x2c] sm:$0xf]
          %v680 = vld [vmem:[%s289 + $0x30] sm:$0xf]
          %v681 = vld [vmem:[%s289 + $0x34] sm:$0xf]
          %v682 = vld [vmem:[%s289 + $0x38] sm:$0xf]
          %v683 = vld [vmem:[%s289 + $0x3c] sm:$0xf]
          %v684 = vld [vmem:[%s289 + $0x40] sm:$0xf]
          %v685 = vld [vmem:[%s289 + $0x44] sm:$0xf]
          %v686 = vld [vmem:[%s289 + $0x48] sm:$0xf]
          %v687 = vld [vmem:[%s289 + $0x4c] sm:$0xf]
          %v688 = vld [vmem:[%s289 + $0x50] sm:$0xf]
          %v689 = vld [vmem:[%s289 + $0x54] sm:$0xf]
          %v690 = vld [vmem:[%s289 + $0x58] sm:$0xf]
          %v691 = vld [vmem:[%s289 + $0x5c] sm:$0xf]
          %v692 = vld [vmem:[%s289 + $0x60] sm:$0xf]
          %v693 = vld [vmem:[%s289 + $0x64] sm:$0xf]
          %v694 = vld [vmem:[%s289 + $0x68] sm:$0xf]
          %v695 = vld [vmem:[%s289 + $0x6c] sm:$0xf]
          %v696 = vld [vmem:[%s289 + $0x70] sm:$0xf]
          %v697 = vld [vmem:[%s289 + $0x74] sm:$0xf]
          %v698 = vld [vmem:[%s289 + $0x78] sm:$0xf]
          %v699 = vld [vmem:[%s289 + $0x7c] sm:$0xf]
          %v708 = vunpack.c.l.b16 %v660
          %v709 = vunpack.c.l.b16 %v661
          %v710 = vunpack.c.l.b16 %v662
          %v711 = vunpack.c.l.b16 %v663
          %v712 = vunpack.c.l.b16 %v664
          %v713 = vunpack.c.l.b16 %v665
          %v714 = vunpack.c.l.b16 %v666
          %v715 = vunpack.c.l.b16 %v667
          %v716 = vpack.c.b16 %v709, %v708
          %v717 = vpack.c.b16 %v711, %v710
          %v718 = vpack.c.b16 %v713, %v712
          %v719 = vpack.c.b16 %v715, %v714
          %v756 = vunpack.c.l.b16 %v668
          %v757 = vunpack.c.l.b16 %v669
          %v758 = vunpack.c.l.b16 %v670
          %v759 = vunpack.c.l.b16 %v671
          %v760 = vunpack.c.l.b16 %v672
          %v761 = vunpack.c.l.b16 %v673
          %v762 = vunpack.c.l.b16 %v674
          %v763 = vunpack.c.l.b16 %v675
          %v764 = vunpack.c.l.b16 %v676
          %v765 = vunpack.c.l.b16 %v677
          %v766 = vunpack.c.l.b16 %v678
          %v767 = vunpack.c.l.b16 %v679
          %v768 = vunpack.c.l.b16 %v680
          %v769 = vunpack.c.l.b16 %v681
          %v770 = vunpack.c.l.b16 %v682
          %v771 = vunpack.c.l.b16 %v683
          %v772 = vunpack.c.l.b16 %v684
          %v773 = vunpack.c.l.b16 %v685
          %v774 = vunpack.c.l.b16 %v686
          %v775 = vunpack.c.l.b16 %v687
          %v776 = vunpack.c.l.b16 %v688
          %v777 = vunpack.c.l.b16 %v689
          %v778 = vunpack.c.l.b16 %v690
          %v779 = vunpack.c.l.b16 %v691
          %v780 = vunpack.c.l.b16 %v692
          %v781 = vunpack.c.l.b16 %v693
          %v782 = vunpack.c.l.b16 %v694
          %v783 = vunpack.c.l.b16 %v695
          %v784 = vunpack.c.l.b16 %v696
          %v785 = vunpack.c.l.b16 %v697
          %v786 = vunpack.c.l.b16 %v698
          %v787 = vunpack.c.l.b16 %v699
          %v788 = vpack.c.b16 %v757, %v756
          %v789 = vpack.c.b16 %v759, %v758
          %v790 = vpack.c.b16 %v761, %v760
          %v791 = vpack.c.b16 %v763, %v762
          %v792 = vpack.c.b16 %v765, %v764
          %v793 = vpack.c.b16 %v767, %v766
          %v794 = vpack.c.b16 %v769, %v768
          %v795 = vpack.c.b16 %v771, %v770
          %v796 = vpack.c.b16 %v773, %v772
          %v797 = vpack.c.b16 %v775, %v774
          %v798 = vpack.c.b16 %v777, %v776
          %v799 = vpack.c.b16 %v779, %v778
          %v800 = vpack.c.b16 %v781, %v780
          %v801 = vpack.c.b16 %v783, %v782
          %v802 = vpack.c.b16 %v785, %v784
          %v803 = vpack.c.b16 %v787, %v786
          %820 = vmatprep.subr.bf16.mxu0 0
          %821 = vmatpush1.bf16.xpose.msra.mxu0 %v795
          %822 = vmatprep.subr.bf16.mxu0 0
          %823 = vmatpush1.bf16.xpose.msra.mxu0 %v794
          %824 = vmatprep.subr.bf16.mxu0 0
          %825 = vmatpush1.bf16.xpose.msra.mxu0 %v793
          %826 = vmatprep.subr.bf16.mxu0 0
          %827 = vmatpush1.bf16.xpose.msra.mxu0 %v792
          %828 = vmatprep.subr.bf16.mxu0 0
          %829 = vmatpush1.bf16.xpose.msra.mxu0 %v791
          %830 = vmatprep.subr.bf16.mxu0 0
          %831 = vmatpush1.bf16.xpose.msra.mxu0 %v790
          %832 = vmatprep.subr.bf16.mxu0 0
          %833 = vmatpush1.bf16.xpose.msra.mxu0 %v789
          %834 = vmatprep.subr.bf16.mxu0 0
          %835 = vmatpush1.bf16.xpose.msra.mxu0 %v788
          %836 = vmatprep.subr.bf16.mxu0 0
          %837 = vmatpush2.bf16.xpose.msra.mxu0 %v803
          %838 = vmatprep.subr.bf16.mxu0 0
          %839 = vmatpush2.bf16.xpose.msra.mxu0 %v802
          %840 = vmatprep.subr.bf16.mxu0 0
          %841 = vmatpush2.bf16.xpose.msra.mxu0 %v801
          %842 = vmatprep.subr.bf16.mxu0 0
          %843 = vmatpush2.bf16.xpose.msra.mxu0 %v800
          %844 = vmatprep.subr.bf16.mxu0 0
          %845 = vmatpush2.bf16.xpose.msra.mxu0 %v799
          %846 = vmatprep.subr.bf16.mxu0 0
          %847 = vmatpush2.bf16.xpose.msra.mxu0 %v798
          %848 = vmatprep.subr.bf16.mxu0 0
          %849 = vmatpush2.bf16.xpose.msra.mxu0 %v797
          %850 = vmatprep.subr.bf16.mxu0 0
          %851 = vmatpush2.bf16.xpose.msra.mxu0 %v796
          %852 = vmatprep.mubr.bf16.mxu0 0
          %853 = vmatmul.mubr.bf16.gmra.mxu0 %v716
          %v854 = vpop.f32.mrf.mxu0
          %v855 = vadd.f32 0.0, %v854
          %v856 = vpop.f32.mrf.mxu0
          %v857 = vadd.f32 0.0, %v856
          %v858 = vpop.f32.mrf.mxu0
          %v859 = vadd.f32 0.0, %v858
          %v860 = vpop.f32.mrf.mxu0
          %v861 = vadd.f32 0.0, %v860
          %862 = vmatprep.mubr.bf16.mxu0 0
          %863 = vmatmul.mubr.bf16.gmra.mxu0 %v717
          %v864 = vpop.f32.mrf.mxu0
          %v865 = vadd.f32 0.0, %v864
          %v866 = vpop.f32.mrf.mxu0
          %v867 = vadd.f32 0.0, %v866
          %v868 = vpop.f32.mrf.mxu0
          %v869 = vadd.f32 0.0, %v868
          %v870 = vpop.f32.mrf.mxu0
          %v871 = vadd.f32 0.0, %v870
          %872 = vmatprep.mubr.bf16.mxu0 0
          %873 = vmatmul.mubr.bf16.gmra.mxu0 %v718
          %v874 = vpop.f32.mrf.mxu0
          %v875 = vadd.f32 0.0, %v874
          %v876 = vpop.f32.mrf.mxu0
          %v877 = vadd.f32 0.0, %v876
          %v878 = vpop.f32.mrf.mxu0
          %v879 = vadd.f32 0.0, %v878
          %v880 = vpop.f32.mrf.mxu0
          %v881 = vadd.f32 0.0, %v880
          %882 = vmatprep.mubr.bf16.mxu0 0
          %883 = vmatmul.mubr.bf16.gmra.mxu0 %v719
          %v884 = vpop.f32.mrf.mxu0
          %v885 = vadd.f32 0.0, %v884
          %v886 = vpop.f32.mrf.mxu0
          %v887 = vadd.f32 0.0, %v886
          %v888 = vpop.f32.mrf.mxu0
          %v889 = vadd.f32 0.0, %v888
          %v890 = vpop.f32.mrf.mxu0
          %v891 = vadd.f32 0.0, %v890
          %892 = vdwg.mxu0
          %893 = vst [vmem:[%s321] sm:$0xff] %v855
          %894 = vst [vmem:[%s321 + $0x8] sm:$0xff] %v857
          %895 = vst [vmem:[%s321 + $0x10] sm:$0xff] %v859
          %896 = vst [vmem:[%s321 + $0x18] sm:$0xff] %v861
          %897 = vst [vmem:[%s321 + $0x20] sm:$0xff] %v865
          %898 = vst [vmem:[%s321 + $0x28] sm:$0xff] %v867
          %899 = vst [vmem:[%s321 + $0x30] sm:$0xff] %v869
          %900 = vst [vmem:[%s321 + $0x38] sm:$0xff] %v871
          %901 = vst [vmem:[%s321 + $0x40] sm:$0xff] %v875
          %902 = vst [vmem:[%s321 + $0x48] sm:$0xff] %v877
          %903 = vst [vmem:[%s321 + $0x50] sm:$0xff] %v879
          %904 = vst [vmem:[%s321 + $0x58] sm:$0xff] %v881
          %905 = vst [vmem:[%s321 + $0x60] sm:$0xff] %v885
          %906 = vst [vmem:[%s321 + $0x68] sm:$0xff] %v887
          %907 = vst [vmem:[%s321 + $0x70] sm:$0xff] %v889
          %908 = vst [vmem:[%s321 + $0x78] sm:$0xff] %v891
        $region60: #{tpu_custom_call.1} parent=31 // pred_fallthru
          _
        %s909 = sand.u32 %s153, 1
        %s910 = scalar_lea.sflag [#allocation6], %s909
        %s911 = sand.u32 %s153, 1
        %s912 = smul.addr %s911, 128
        %s913 = scalar_lea.vmem [#allocation10], %s912
        // Predicated region
        $region61: #{tpu_custom_call.1} parent=31 // pred_check
          %p914 = pneg %p163
        $region62: #{tpu_custom_call.1} parent=31 // pred_check_branch
          %916 = sbr.rel (%p914) target = $region64
        $region63: #{tpu_custom_call.1} parent=31 // pred_region
          %p917 = scmp.lt.s32.totalorder %s27, 4
          %s918 = scalar_select %p917, 0, %s28
          %s919 = ssub.s32 %s27, 4
          %p920 = scmp.gt.s32.totalorder %s919, 0
          %s921 = scalar_select %p920, %s919, 0
          %s922 = smul.u32 8, %s918
          %s923 = smul.u32 2, %s921
          %s925 = ssub.s32 2048, 2048
          %926 = vsyncadd %s910, %s925
          %s927 = smul.addr %s922, 8
          %s928 = sadd.s32 %s923, %s927
          %s929 = smul.addr %s928, 128
          %s930 = scalar_lea.hbm %s3, %s929
          %s931 = sshll.u32 %s913, 4
          %s932 = int_to_ptr.vmem [resolvable:$true] %s931
          %937 = dma.vmem_to_hbm [thread:$0]  %s932, 2048, %s930, %s910, 256, 1024, 16
        $region64: #{tpu_custom_call.1} parent=31 // pred_fallthru
          _
      $region32: #{tpu_custom_call.1} parent=5 // pred_fallthru
        _
      %p938 = scmp.le.s32.totalorder 2, %s18
      // Predicated region
      $region65: #{tpu_custom_call.1} parent=5 // pred_check
        %p939 = pneg %p938
      $region66: #{tpu_custom_call.1} parent=5 // pred_check_branch
        %941 = sbr.rel (%p939) target = $region68
      $region67: #{tpu_custom_call.1} parent=5 // pred_region
        %s942 = ssub.s32 %s18, 2
        // Predicated region
        $region69: #{tpu_custom_call.1} parent=67 // pred_check
          %p943 = pneg %p169
        $region70: #{tpu_custom_call.1} parent=67 // pred_check_branch
          %945 = sbr.rel (%p943) target = $region72
        $region71: #{tpu_custom_call.1} parent=67 // pred_region
          %s946 = sand.u32 %s154, 1
          %s947 = scalar_lea.sflag [#allocation6], %s946
          %s948 = sand.u32 %s154, 1
          %s949 = smul.addr %s948, 128
          %s950 = scalar_lea.vmem [#allocation10], %s949
          %951 = dma.done %s947, 2048
        $region72: #{tpu_custom_call.1} parent=67 // pred_fallthru
          _
      $region68: #{tpu_custom_call.1} parent=5 // pred_fallthru
        _
    $region6: #{tpu_custom_call.1} parent=1 // loop_footer
      %s22 = sadd.s32 1, %s18
    $region7: #{tpu_custom_call.1} parent=1 // loop_footer_branch
      %17 = sbr.rel target = $region3
    $region8: #{tpu_custom_call.1} parent=1 // loop_exit
      _
    %952 = vsyncpa [#allocation5], 1
    %s953 = scalar_lea.sflag [#allocation5], 1
    %954 = vsyncpa %s953, 1
    %955 = vsyncpa [#allocation8], 1
    %s956 = scalar_lea.sflag [#allocation8], 1
    %957 = vsyncpa %s956, 1
    %958 = vsyncpa [#allocation6], 1
    %s959 = scalar_lea.sflag [#allocation6], 1
    %960 = vsyncpa %s959, 1

</llo_original>
